<compile_context>
chip_gen: v7x
topology: tpu7x:2x2x1
jax: 0.10.0
libtpu: 0.0.40
codegen_flags: <defaults>
</compile_context>

<pallas_src>
import jax
import jax.numpy as jnp
from jax.experimental import pallas as pl
from jax.experimental.pallas import tpu as pltpu


# -----------------------------------------------------------------------------
# Fused kernel:
#   h   = relu( ctx @ W1_ctx (shared over candidates) + cand @ W1_cand + b1 )
#   out = h @ W2_bd + b2
# with block-diagonal (group-structured) shared weights.
# -----------------------------------------------------------------------------
def _fused_analogy_kernel(ctx_ref, cand_ref, w1c_ref, w1x_ref, b1_ref,
                          w2_ref, b2_ref, o_ref):
    tb = ctx_ref.shape[0]                 # batch-tile rows (samples)
    nc = cand_ref.shape[0] // tb          # candidates per sample (8)
    gh = w1c_ref.shape[1]                 # G * hidden

    # bf16 MXU inputs (cast only if the producer didn't already emit bf16),
    # f32 accumulation; elementwise epilogue in f32 (valid on all gens).
    ctx = ctx_ref[...]
    cand = cand_ref[...]
    if ctx.dtype != jnp.bfloat16:
        ctx = ctx.astype(jnp.bfloat16)                  # (tb, c_ctx*e)
    if cand.dtype != jnp.bfloat16:
        cand = cand.astype(jnp.bfloat16)                # (tb*nc, e)

    # Layer 1, split into a candidate-independent context part (computed once
    # per sample, reused for all candidates) and a small candidate part.
    h_ctx = jnp.dot(ctx, w1c_ref[...],
                    preferred_element_type=jnp.float32)          # (tb, gh)
    h_cand = jnp.dot(cand, w1x_ref[...],
                     preferred_element_type=jnp.float32)         # (tb*nc, gh)

    # Fused layer-1 epilogue: bias add + context broadcast + ReLU + bf16 cast
    # in a single streamed expression (no separate full-size intermediates).
    h2 = jnp.maximum(
        h_cand.reshape(tb, nc, gh) + b1_ref[...] + h_ctx[:, None, :],
        0.0,
    ).astype(jnp.bfloat16).reshape(tb * nc, gh)

    # Layer 2 (block-diagonal shared weights, lane-dense 128-wide output).
    out = jnp.dot(h2, w2_ref[...],
                  preferred_element_type=jnp.float32) + b2_ref[...]
    o_ref[...] = out.astype(o_ref.dtype)                         # bf16 (tb*nc, G*O)


def _choose_tiling(b, cap=512):
    """Return (tile_b, b_padded).

    Prefers a tile that divides b, is a multiple of 8, <= cap, and yields a
    grid of >= 2 steps (keeps both v7x TensorCores busy and gives the
    auto-pipeline overlap).  Large batches with no clean divisor are padded to
    a multiple of 64 instead of producing one giant tile.
    """
    single_step = None
    for t in (512, 256, 128, 64, 32, 16, 8):
        if t <= cap and b % t == 0:
            if b // t >= 2:
                return t, b
            if single_step is None:
                single_step = t
    if single_step is not None:
        return single_step, b
    if b <= cap:
        # Tiny batch with no multiple-of-8 divisor: a single full-extent tile
        # is legal (block shape == full array dims).
        return b, b
    # Large, non-divisible batch: pad to a multiple of 64.
    b_pad = ((b + 63) // 64) * 64
    return 64, b_pad


def fused_analogy_pallas(ctx2d, cand2d, w1_ctx, w1_cand, b1, w2, b2, *, n_cand):
    """ctx2d: (b, c_ctx*e), cand2d: (b*n_cand, e)  ->  (b*n_cand, G*O) bf16."""
    b, ce = ctx2d.shape
    bn, e = cand2d.shape
    assert bn == b * n_cand
    gh = w1_ctx.shape[1]
    go = w2.shape[1]

    tile_b, b_pad = _choose_tiling(b)
    if b_pad != b:
        ctx2d = jnp.pad(ctx2d, ((0, b_pad - b), (0, 0)))
        cand2d = jnp.pad(cand2d, ((0, (b_pad - b) * n_cand), (0, 0)))
    bn_pad = b_pad * n_cand
    grid = (b_pad // tile_b,)

    in_bytes = (ctx2d.size * ctx2d.dtype.itemsize
                + cand2d.size * cand2d.dtype.itemsize)
    w_bytes = (w1_ctx.size + w1_cand.size + w2.size) * 2 + (b1.size + b2.size) * 4
    out_bytes = bn_pad * go * 2
    flops = 2 * (b_pad * ce * gh + bn_pad * e * gh + bn_pad * gh * go)

    out = pl.pallas_call(
        _fused_analogy_kernel,
        out_shape=jax.ShapeDtypeStruct((bn_pad, go), jnp.bfloat16),
        grid=grid,
        in_specs=[
            pl.BlockSpec((tile_b, ce), lambda i: (i, 0)),            # context tile
            pl.BlockSpec((tile_b * n_cand, e), lambda i: (i, 0)),    # candidate tile
            pl.BlockSpec(w1_ctx.shape, lambda i: (0, 0)),            # resident weights
            pl.BlockSpec(w1_cand.shape, lambda i: (0, 0)),
            pl.BlockSpec(b1.shape, lambda i: (0, 0)),
            pl.BlockSpec(w2.shape, lambda i: (0, 0)),
            pl.BlockSpec(b2.shape, lambda i: (0, 0)),
        ],
        out_specs=pl.BlockSpec((tile_b * n_cand, go), lambda i: (i, 0)),
        compiler_params=pltpu.CompilerParams(
            dimension_semantics=("parallel",),
            vmem_limit_bytes=32 * 1024 * 1024),
        cost_estimate=pl.CostEstimate(flops=flops, transcendentals=0,
                                      bytes_accessed=in_bytes + w_bytes + out_bytes),
    )(ctx2d, cand2d, w1_ctx, w1_cand, b1, w2, b2)

    if b_pad != b:
        out = out[: b * n_cand]
    return out


# -----------------------------------------------------------------------------
# Model: parameter init + forward
# -----------------------------------------------------------------------------
class DiscriListenerAnalogyModelPallas:
    def __init__(self, key, *, num_context=8, embed_dim=32,
                 group_size=8, hidden_dim=64, out_per_group=32):
        self.num_context = num_context
        self.embed_dim = embed_dim
        self.group_size = group_size
        assert embed_dim % group_size == 0
        self.num_groups = embed_dim // group_size
        self.hidden_dim = hidden_dim
        self.out_per_group = out_per_group

        c = num_context + 1                    # context panels + 1 candidate
        d_in = c * group_size                  # flattened per-group input
        G, gs, H, O, e = self.num_groups, group_size, hidden_dim, out_per_group, embed_dim

        k1, k2, k3, k4 = jax.random.split(key, 4)
        lim1 = 1.0 / jnp.sqrt(d_in)
        lim2 = 1.0 / jnp.sqrt(hidden_dim)
        # Per-group shared MLP weights (kept in f32 for the reference).
        self.w1 = jax.random.uniform(k1, (d_in, H), jnp.float32, -lim1, lim1)
        self.b1 = jax.random.uniform(k2, (H,), jnp.float32, -lim1, lim1)
        self.w2 = jax.random.uniform(k3, (H, O), jnp.float32, -lim2, lim2)
        self.b2 = jax.random.uniform(k4, (O,), jnp.float32, -lim2, lim2)

        # ---- Block-diagonal fused weights (built once) ----
        # W1_bd[j*e + u*gs + k, v*H + h] = w1[j*gs + k, h] * (u == v)
        eye = jnp.eye(G, dtype=jnp.float32)
        w1_r = self.w1.reshape(c, gs, H)
        w1_bd = jnp.einsum('jkh,uv->jukvh', w1_r, eye).reshape(c * e, G * H)
        self.w1_ctx = w1_bd[:num_context * e, :].astype(jnp.bfloat16)   # (c_ctx*e, G*H)
        self.w1_cand = w1_bd[num_context * e:, :].astype(jnp.bfloat16)  # (e, G*H)
        # W2_bd[u*H + h, v*O + o] = w2[h, o] * (u == v)
        self.w2_bd = jnp.einsum('ho,uv->uhvo', self.w2, eye).reshape(
            G * H, G * O).astype(jnp.bfloat16)                          # (G*H, G*O)
        self.b1_bd = jnp.tile(self.b1, G).reshape(1, G * H)             # f32
        self.b2_bd = jnp.tile(self.b2, G).reshape(1, G * O)             # f32

    def __call__(self, listener_context, listener_candidates):
        # listener_context: (b, c_ctx, e), listener_candidates: (b, 8, e)
        # Inputs may be f32 or bf16; bf16 end-to-end is fastest (no in-kernel cast).
        b, c_ctx, e = listener_context.shape
        n_cand = listener_candidates.shape[1]          # = 8 in the reference

        # Free (layout-preserving) reshapes only — no broadcast / concat /
        # transpose materialized in HBM.
        ctx2d = listener_context.reshape(b, c_ctx * e)
        cand2d = listener_candidates.reshape(b * n_cand, e)

        out2d = fused_analogy_pallas(
            ctx2d, cand2d, self.w1_ctx, self.w1_cand,
            self.b1_bd, self.w2_bd, self.b2_bd, n_cand=n_cand)

        return out2d.reshape(b, n_cand, -1)            # (b, 8, G*O) bf16


# -----------------------------------------------------------------------------
# Pure-JAX reference implementing the original module semantics directly
# (broadcast / concat / grouping / shared MLP), mirroring the kernel numerics
# (bf16 matmul inputs, f32 accumulation, f32 bias + ReLU; f32 output).
# -----------------------------------------------------------------------------
def _reference(model, listener_context, listener_candidates):
    b, c_ctx, e = listener_context.shape
    n_cand = listener_candidates.shape[1]
    ctx = jnp.broadcast_to(listener_context[:, None, :, :], (b, n_cand, c_ctx, e))
    merged = jnp.concatenate([ctx, listener_candidates[:, :, None, :]], axis=2)
    c = c_ctx + 1
    merged = merged.reshape(b * n_cand, c, e)
    gs, G = model.group_size, model.num_groups
    B = b * n_cand
    grouped = merged.reshape(B, c, G, gs)
    grouped = jnp.transpose(grouped, (2, 0, 1, 3)).reshape(G * B, c * gs)
    xg = grouped.astype(jnp.bfloat16)
    w1 = model.w1.astype(jnp.bfloat16)
    w2 = model.w2.astype(jnp.bfloat16)
    h = jnp.dot(xg, w1, preferred_element_type=jnp.float32) + model.b1
    h = jnp.maximum(h, 0.0)
    out = jnp.dot(h.astype(jnp.bfloat16), w2,
                  preferred_element_type=jnp.float32) + model.b2
    out = out.reshape(G, B, model.out_per_group)
    out = jnp.transpose(out, (1, 0, 2)).reshape(B, G * model.out_per_group)
    return out.reshape(b, n_cand, -1)


if __name__ == "__main__":
    key = jax.random.PRNGKey(0)
    k_ctx, k_cand, k_params = jax.random.split(key, 3)

    b, c_ctx, n_cand, e = 2, 8, 8, 32
    # Producer emits bf16 directly (review item 2): no in-kernel input cast.
    listener_context = jax.random.normal(
        k_ctx, (b, c_ctx, e), jnp.float32).astype(jnp.bfloat16)
    listener_candidates = jax.random.normal(
        k_cand, (b, n_cand, e), jnp.float32).astype(jnp.bfloat16)

    model = DiscriListenerAnalogyModelPallas(
        k_params, num_context=c_ctx, embed_dim=e,
        group_size=8, hidden_dim=64, out_per_group=32)

    fwd = jax.jit(model.__call__)
    out = jax.block_until_ready(fwd(listener_context, listener_candidates))

    ref = _reference(model, listener_context, listener_candidates)
    assert out.shape == (b, n_cand, model.num_groups * model.out_per_group), out.shape
    assert out.dtype == jnp.bfloat16, out.dtype
    out_f32 = out.astype(jnp.float32)
    max_err = float(jnp.max(jnp.abs(out_f32 - ref)))
    # Tolerance widened vs the f32-output version: final result is bf16-rounded.
    assert jnp.allclose(out_f32, ref, atol=3e-2, rtol=3e-2), \
        f"mismatch vs reference: {max_err}"

    print("KERNEL_OK")
</pallas_src>

<mosaic_0001>
module attributes {stable_mosaic.version = 11 : i64} {
  func.func @_fused_analogy_kernel(%arg0: i32, %arg1: memref<2x256xbf16, #tpu.memory_space<vmem>>, %arg2: memref<16x32xbf16, #tpu.memory_space<vmem>>, %arg3: memref<256x256xbf16, #tpu.memory_space<vmem>>, %arg4: memref<32x256xbf16, #tpu.memory_space<vmem>>, %arg5: memref<1x256xf32, #tpu.memory_space<vmem>>, %arg6: memref<256x128xbf16, #tpu.memory_space<vmem>>, %arg7: memref<1x128xf32, #tpu.memory_space<vmem>>, %arg8: memref<16x128xbf16, #tpu.memory_space<vmem>>) attributes {dimension_semantics = [#tpu.dimension_semantics<parallel>], iteration_bounds = array<i64: 1>, scalar_prefetch = 0 : i64, scratch_operands = 0 : i64, tpu.core_type = #tpu.core_type<tc>, window_params = [{transform_indices = @transform_0, window_bounds = array<i64: 2, 256>}, {transform_indices = @transform_1, window_bounds = array<i64: 16, 32>}, {pipeline_mode = #tpu.pipeline_mode<synchronous>, transform_indices = @transform_2, window_bounds = array<i64: 256, 256>}, {pipeline_mode = #tpu.pipeline_mode<synchronous>, transform_indices = @transform_3, window_bounds = array<i64: 32, 256>}, {pipeline_mode = #tpu.pipeline_mode<synchronous>, transform_indices = @transform_4, window_bounds = array<i64: 1, 256>}, {pipeline_mode = #tpu.pipeline_mode<synchronous>, transform_indices = @transform_5, window_bounds = array<i64: 256, 128>}, {pipeline_mode = #tpu.pipeline_mode<synchronous>, transform_indices = @transform_6, window_bounds = array<i64: 1, 128>}, {transform_indices = @transform_7, window_bounds = array<i64: 16, 128>}]} {
    %c0 = arith.constant 0 : index
    %c0_0 = arith.constant 0 : index
    %0 = vector.load %arg1[%c0, %c0_0] : memref<2x256xbf16, #tpu.memory_space<vmem>>, vector<2x256xbf16>
    %c0_1 = arith.constant 0 : index
    %c0_2 = arith.constant 0 : index
    %1 = vector.load %arg2[%c0_1, %c0_2] : memref<16x32xbf16, #tpu.memory_space<vmem>>, vector<16x32xbf16>
    %c0_3 = arith.constant 0 : index
    %c0_4 = arith.constant 0 : index
    %2 = vector.load %arg3[%c0_3, %c0_4] : memref<256x256xbf16, #tpu.memory_space<vmem>>, vector<256x256xbf16>
    %cst = arith.constant dense<0.000000e+00> : vector<2x256xf32>
    %3 = tpu.matmul %0, %2, %cst {dimension_numbers = #tpu.dot_dimension_numbers<[1], [0], [0], [1], [0, 0, 1, 1], [], []>} : vector<2x256xbf16>, vector<256x256xbf16>, vector<2x256xf32> -> vector<2x256xf32>
    %c0_5 = arith.constant 0 : index
    %c0_6 = arith.constant 0 : index
    %4 = vector.load %arg4[%c0_5, %c0_6] : memref<32x256xbf16, #tpu.memory_space<vmem>>, vector<32x256xbf16>
    %cst_7 = arith.constant dense<0.000000e+00> : vector<16x256xf32>
    %5 = tpu.matmul %1, %4, %cst_7 {dimension_numbers = #tpu.dot_dimension_numbers<[1], [0], [0], [1], [0, 0, 1, 1], [], []>} : vector<16x32xbf16>, vector<32x256xbf16>, vector<16x256xf32> -> vector<16x256xf32>
    %6 = vector.shape_cast %5 : vector<16x256xf32> to vector<2x8x256xf32>
    %c0_8 = arith.constant 0 : index
    %c0_9 = arith.constant 0 : index
    %7 = vector.load %arg5[%c0_8, %c0_9] : memref<1x256xf32, #tpu.memory_space<vmem>>, vector<1x256xf32>
    %8 = vector.shape_cast %7 : vector<1x256xf32> to vector<1x1x256xf32>
    %9 = vector.broadcast %8 : vector<1x1x256xf32> to vector<2x8x256xf32>
    %10 = arith.addf %6, %9 : vector<2x8x256xf32>
    %11 = vector.shape_cast %3 : vector<2x256xf32> to vector<2x1x256xf32>
    %12 = vector.broadcast %11 : vector<2x1x256xf32> to vector<2x8x256xf32>
    %13 = arith.addf %10, %12 : vector<2x8x256xf32>
    %cst_10 = arith.constant 0.000000e+00 : f32
    %14 = vector.broadcast %cst_10 : f32 to vector<2x8x256xf32>
    %15 = arith.maximumf %13, %14 : vector<2x8x256xf32>
    %16 = arith.truncf %15 : vector<2x8x256xf32> to vector<2x8x256xbf16>
    %17 = vector.shape_cast %16 : vector<2x8x256xbf16> to vector<16x256xbf16>
    %c0_11 = arith.constant 0 : index
    %c0_12 = arith.constant 0 : index
    %18 = vector.load %arg6[%c0_11, %c0_12] : memref<256x128xbf16, #tpu.memory_space<vmem>>, vector<256x128xbf16>
    %cst_13 = arith.constant dense<0.000000e+00> : vector<16x128xf32>
    %19 = tpu.matmul %17, %18, %cst_13 {dimension_numbers = #tpu.dot_dimension_numbers<[1], [0], [0], [1], [0, 0, 1, 1], [], []>} : vector<16x256xbf16>, vector<256x128xbf16>, vector<16x128xf32> -> vector<16x128xf32>
    %c0_14 = arith.constant 0 : index
    %c0_15 = arith.constant 0 : index
    %20 = vector.load %arg7[%c0_14, %c0_15] : memref<1x128xf32, #tpu.memory_space<vmem>>, vector<1x128xf32>
    %21 = vector.broadcast %20 : vector<1x128xf32> to vector<16x128xf32>
    %22 = arith.addf %19, %21 : vector<16x128xf32>
    %23 = arith.truncf %22 : vector<16x128xf32> to vector<16x128xbf16>
    %c0_16 = arith.constant 0 : index
    %c0_17 = arith.constant 0 : index
    %24 = vector.load %arg8[%c0_16, %c0_17] : memref<16x128xbf16, #tpu.memory_space<vmem>>, vector<16x128xbf16>
    tpu.vector_store %arg8[%c0_16, %c0_17], %23 {strides = array<i32>} : memref<16x128xbf16, #tpu.memory_space<vmem>>, vector<16x128xbf16>,
    return
  }
  func.func @transform_0(%arg0: i32) -> (i32, i32) {
    %c0_i32 = arith.constant 0 : i32
    %c0_i32_0 = arith.constant 0 : i32
    return %arg0, %c0_i32 : i32, i32
  }
  func.func @transform_1(%arg0: i32) -> (i32, i32) {
    %c0_i32 = arith.constant 0 : i32
    %c0_i32_0 = arith.constant 0 : i32
    return %arg0, %c0_i32 : i32, i32
  }
  func.func @transform_2(%arg0: i32) -> (i32, i32) {
    %c0_i32 = arith.constant 0 : i32
    %c0_i32_0 = arith.constant 0 : i32
    %c0_i32_1 = arith.constant 0 : i32
    return %c0_i32, %c0_i32_0 : i32, i32
  }
  func.func @transform_3(%arg0: i32) -> (i32, i32) {
    %c0_i32 = arith.constant 0 : i32
    %c0_i32_0 = arith.constant 0 : i32
    %c0_i32_1 = arith.constant 0 : i32
    return %c0_i32, %c0_i32_0 : i32, i32
  }
  func.func @transform_4(%arg0: i32) -> (i32, i32) {
    %c0_i32 = arith.constant 0 : i32
    %c0_i32_0 = arith.constant 0 : i32
    %c0_i32_1 = arith.constant 0 : i32
    return %c0_i32, %c0_i32_0 : i32, i32
  }
  func.func @transform_5(%arg0: i32) -> (i32, i32) {
    %c0_i32 = arith.constant 0 : i32
    %c0_i32_0 = arith.constant 0 : i32
    %c0_i32_1 = arith.constant 0 : i32
    return %c0_i32, %c0_i32_0 : i32, i32
  }
  func.func @transform_6(%arg0: i32) -> (i32, i32) {
    %c0_i32 = arith.constant 0 : i32
    %c0_i32_0 = arith.constant 0 : i32
    %c0_i32_1 = arith.constant 0 : i32
    return %c0_i32, %c0_i32_0 : i32, i32
  }
  func.func @transform_7(%arg0: i32) -> (i32, i32) {
    %c0_i32 = arith.constant 0 : i32
    %c0_i32_0 = arith.constant 0 : i32
    return %arg0, %c0_i32 : i32, i32
  }
}

</mosaic_0001>

<llo_original>
// kernel: a_call__.1
$region0: #{a_call__.1}
  #allocation0 [shape = 'u32[]', space=smem, size = 0x4, offset = 0x4, fixed_abs, tag = 'smem constant byte address 0x4 - core index']
  #allocation1 [shape = 'u32[144,128]{1,0:T(1,128)}', space=vmem, size = 0x12000, scoped, tag = 'internal scratch']
  %s0 = inlined_call_operand.vmem [shape: bf16[2,256], index: 0, kind: input, shape index: {}]
  %s1 = inlined_call_operand.vmem [shape: bf16[16,32], index: 1, kind: input, shape index: {}]
  %s2 = inlined_call_operand.vmem [shape: bf16[256,256], index: 2, kind: input, shape index: {}]
  %s3 = inlined_call_operand.vmem [shape: bf16[32,256], index: 3, kind: input, shape index: {}]
  %s4 = inlined_call_operand.vmem [shape: f32[1,256], index: 4, kind: input, shape index: {}]
  %s5 = inlined_call_operand.vmem [shape: bf16[256,128], index: 5, kind: input, shape index: {}]
  %s6 = inlined_call_operand.vmem [shape: f32[1,128], index: 6, kind: input, shape index: {}]
  %s7 = inlined_call_operand.hbm [shape: bf16[16,128], index: 7, kind: output, shape index: {}]
  %s8 = sld [smem:[#allocation0]]
  $region38: #{a_call__.1} parent=0
    _
  %s10 = ssub.s32 1, %s8
  %s11 = scalar_select 0, %s10, %s8
  $region1: #{a_call__.1} parent=0
    #allocation2 [shape = 'u8[4096]{0}', space=vmem, size = 0x1000, scoped, tag = 'output window, operand 0, single buffered']
    #allocation3 [shape = 's32[1]{0}', space=sflag, size = 0x4, scoped, tag = 'scoped memory for a_call__.1']
    %12 = vsyncpa [#allocation3], 0
    // Predicated region
    $region2: #{a_call__.1} parent=1 // pred_check
      _
    $region3: #{a_call__.1} parent=1 // pred_check_branch
      %14 = sbr.rel (0) target = $region5
    $region4: #{a_call__.1} parent=1 // pred_region
      _
    $region5: #{a_call__.1} parent=1 // pred_fallthru
      _
    // Predicated region
    $region6: #{a_call__.1} parent=1 // pred_check
      _
    $region7: #{a_call__.1} parent=1 // pred_check_branch
      %16 = sbr.rel (0) target = $region9
    $region8: #{a_call__.1} parent=1 // pred_region
      _
    $region9: #{a_call__.1} parent=1 // pred_fallthru
      _
    // Predicated region
    $region10: #{a_call__.1} parent=1 // pred_check
      _
    $region11: #{a_call__.1} parent=1 // pred_check_branch
      %18 = sbr.rel (0) target = $region13
    $region12: #{a_call__.1} parent=1 // pred_region
      _
    $region13: #{a_call__.1} parent=1 // pred_fallthru
      _
    // Predicated region
    $region14: #{a_call__.1} parent=1 // pred_check
      _
    $region15: #{a_call__.1} parent=1 // pred_check_branch
      %20 = sbr.rel (0) target = $region17
    $region16: #{a_call__.1} parent=1 // pred_region
      _
    $region17: #{a_call__.1} parent=1 // pred_fallthru
      _
    // Predicated region
    $region18: #{a_call__.1} parent=1 // pred_check
      _
    $region19: #{a_call__.1} parent=1 // pred_check_branch
      %22 = sbr.rel (0) target = $region21
    $region20: #{a_call__.1} parent=1 // pred_region
      _
    $region21: #{a_call__.1} parent=1 // pred_fallthru
      _
    // Predicated region
    $region22: #{a_call__.1} parent=1 // pred_check
      _
    $region23: #{a_call__.1} parent=1 // pred_check_branch
      %24 = sbr.rel (0) target = $region25
    $region24: #{a_call__.1} parent=1 // pred_region
      _
    $region25: #{a_call__.1} parent=1 // pred_fallthru
      _
    // Predicated region
    $region26: #{a_call__.1} parent=1 // pred_check
      _
    $region27: #{a_call__.1} parent=1 // pred_check_branch
      %26 = sbr.rel (0) target = $region29
    $region28: #{a_call__.1} parent=1 // pred_region
      _
    $region29: #{a_call__.1} parent=1 // pred_fallthru
      _
    %v28 = vld [vmem:[%s0] sm:$0x3]
    %v29 = vld [vmem:[%s1] sm:$0xf]
    %v30 = vld [vmem:[%s1 + $0x4] sm:$0xf]
    %v31 = vld [vmem:[%s2] sm:$0xff]
    %v32 = vld [vmem:[%s2 + $0x8] sm:$0xff]
    %v33 = vld [vmem:[%s2 + $0x10] sm:$0xff]
    %v34 = vld [vmem:[%s2 + $0x18] sm:$0xff]
    %v35 = vld [vmem:[%s2 + $0x20] sm:$0xff]
    %v36 = vld [vmem:[%s2 + $0x28] sm:$0xff]
    %v37 = vld [vmem:[%s2 + $0x30] sm:$0xff]
    %v38 = vld [vmem:[%s2 + $0x38] sm:$0xff]
    %v39 = vld [vmem:[%s2 + $0x40] sm:$0xff]
    %v40 = vld [vmem:[%s2 + $0x48] sm:$0xff]
    %v41 = vld [vmem:[%s2 + $0x50] sm:$0xff]
    %v42 = vld [vmem:[%s2 + $0x58] sm:$0xff]
    %v43 = vld [vmem:[%s2 + $0x60] sm:$0xff]
    %v44 = vld [vmem:[%s2 + $0x68] sm:$0xff]
    %v45 = vld [vmem:[%s2 + $0x70] sm:$0xff]
    %v46 = vld [vmem:[%s2 + $0x78] sm:$0xff]
    %v47 = vld [vmem:[%s2 + $0x80] sm:$0xff]
    %v48 = vld [vmem:[%s2 + $0x88] sm:$0xff]
    %v49 = vld [vmem:[%s2 + $0x90] sm:$0xff]
    %v50 = vld [vmem:[%s2 + $0x98] sm:$0xff]
    %v51 = vld [vmem:[%s2 + $0xa0] sm:$0xff]
    %v52 = vld [vmem:[%s2 + $0xa8] sm:$0xff]
    %v53 = vld [vmem:[%s2 + $0xb0] sm:$0xff]
    %v54 = vld [vmem:[%s2 + $0xb8] sm:$0xff]
    %v55 = vld [vmem:[%s2 + $0xc0] sm:$0xff]
    %v56 = vld [vmem:[%s2 + $0xc8] sm:$0xff]
    %v57 = vld [vmem:[%s2 + $0xd0] sm:$0xff]
    %v58 = vld [vmem:[%s2 + $0xd8] sm:$0xff]
    %v59 = vld [vmem:[%s2 + $0xe0] sm:$0xff]
    %v60 = vld [vmem:[%s2 + $0xe8] sm:$0xff]
    %v61 = vld [vmem:[%s2 + $0xf0] sm:$0xff]
    %v62 = vld [vmem:[%s2 + $0xf8] sm:$0xff]
    %v65 = vunpack.c.l.s4 1966171168
    %v66 = vunpack.c.0.s8 %v65
    %v67 = vlaneseq
    %v68 = vshrl.u32 %v67, 7
    %v69 = vsub.s32 %v66, %v68
    %v70 = vrot.slane %v28, %v69
    %v71 = vcombine.high %v70, %v70
    %v73 = vunpack.c.l.s4 1966171168
    %v74 = vunpack.c.0.s8 %v73
    %v75 = vlaneseq
    %v76 = vshrl.u32 %v75, 7
    %v77 = vsub.s32 %v74, %v76
    %v78 = vrot.slane %v70, %v77
    %v80 = vunpack.c.l.s4 1966171168
    %v81 = vunpack.c.0.s8 %v80
    %v82 = vlaneseq
    %v83 = vshrl.u32 %v82, 7
    %v84 = vsub.s32 %v81, %v83
    %v85 = vrot.slane %v71, %v84
    %v120 = vunpack.c.l.b16 %v31
    %v121 = vunpack.c.h.b16 %v31
    %v122 = vunpack.c.l.b16 %v32
    %v123 = vunpack.c.h.b16 %v32
    %v124 = vunpack.c.l.b16 %v33
    %v125 = vunpack.c.h.b16 %v33
    %v126 = vunpack.c.l.b16 %v34
    %v127 = vunpack.c.h.b16 %v34
    %v128 = vunpack.c.l.b16 %v35
    %v129 = vunpack.c.h.b16 %v35
    %v130 = vunpack.c.l.b16 %v36
    %v131 = vunpack.c.h.b16 %v36
    %v132 = vunpack.c.l.b16 %v37
    %v133 = vunpack.c.h.b16 %v37
    %v134 = vunpack.c.l.b16 %v38
    %v135 = vunpack.c.h.b16 %v38
    %v136 = vunpack.c.l.b16 %v39
    %v137 = vunpack.c.h.b16 %v39
    %v138 = vunpack.c.l.b16 %v40
    %v139 = vunpack.c.h.b16 %v40
    %v140 = vunpack.c.l.b16 %v41
    %v141 = vunpack.c.h.b16 %v41
    %v142 = vunpack.c.l.b16 %v42
    %v143 = vunpack.c.h.b16 %v42
    %v144 = vunpack.c.l.b16 %v43
    %v145 = vunpack.c.h.b16 %v43
    %v146 = vunpack.c.l.b16 %v44
    %v147 = vunpack.c.h.b16 %v44
    %v148 = vunpack.c.l.b16 %v45
    %v149 = vunpack.c.h.b16 %v45
    %v150 = vunpack.c.l.b16 %v46
    %v151 = vunpack.c.h.b16 %v46
    %v152 = vunpack.c.l.b16 %v47
    %v153 = vunpack.c.h.b16 %v47
    %v154 = vunpack.c.l.b16 %v48
    %v155 = vunpack.c.h.b16 %v48
    %v156 = vunpack.c.l.b16 %v49
    %v157 = vunpack.c.h.b16 %v49
    %v158 = vunpack.c.l.b16 %v50
    %v159 = vunpack.c.h.b16 %v50
    %v160 = vunpack.c.l.b16 %v51
    %v161 = vunpack.c.h.b16 %v51
    %v162 = vunpack.c.l.b16 %v52
    %v163 = vunpack.c.h.b16 %v52
    %v164 = vunpack.c.l.b16 %v53
    %v165 = vunpack.c.h.b16 %v53
    %v166 = vunpack.c.l.b16 %v54
    %v167 = vunpack.c.h.b16 %v54
    %v168 = vunpack.c.l.b16 %v55
    %v169 = vunpack.c.h.b16 %v55
    %v170 = vunpack.c.l.b16 %v56
    %v171 = vunpack.c.h.b16 %v56
    %v172 = vunpack.c.l.b16 %v57
    %v173 = vunpack.c.h.b16 %v57
    %v174 = vunpack.c.l.b16 %v58
    %v175 = vunpack.c.h.b16 %v58
    %v176 = vunpack.c.l.b16 %v59
    %v177 = vunpack.c.h.b16 %v59
    %v178 = vunpack.c.l.b16 %v60
    %v179 = vunpack.c.h.b16 %v60
    %v180 = vunpack.c.l.b16 %v61
    %v181 = vunpack.c.h.b16 %v61
    %v182 = vunpack.c.l.b16 %v62
    %v183 = vunpack.c.h.b16 %v62
    %v184 = vpack.c.b16 %v122, %v120
    %v185 = vpack.c.b16 %v123, %v121
    %v186 = vpack.c.b16 %v126, %v124
    %v187 = vpack.c.b16 %v127, %v125
    %v188 = vpack.c.b16 %v130, %v128
    %v189 = vpack.c.b16 %v131, %v129
    %v190 = vpack.c.b16 %v134, %v132
    %v191 = vpack.c.b16 %v135, %v133
    %v192 = vpack.c.b16 %v138, %v136
    %v193 = vpack.c.b16 %v139, %v137
    %v194 = vpack.c.b16 %v142, %v140
    %v195 = vpack.c.b16 %v143, %v141
    %v196 = vpack.c.b16 %v146, %v144
    %v197 = vpack.c.b16 %v147, %v145
    %v198 = vpack.c.b16 %v150, %v148
    %v199 = vpack.c.b16 %v151, %v149
    %v200 = vpack.c.b16 %v154, %v152
    %v201 = vpack.c.b16 %v155, %v153
    %v202 = vpack.c.b16 %v158, %v156
    %v203 = vpack.c.b16 %v159, %v157
    %v204 = vpack.c.b16 %v162, %v160
    %v205 = vpack.c.b16 %v163, %v161
    %v206 = vpack.c.b16 %v166, %v164
    %v207 = vpack.c.b16 %v167, %v165
    %v208 = vpack.c.b16 %v170, %v168
    %v209 = vpack.c.b16 %v171, %v169
    %v210 = vpack.c.b16 %v174, %v172
    %v211 = vpack.c.b16 %v175, %v173
    %v212 = vpack.c.b16 %v178, %v176
    %v213 = vpack.c.b16 %v179, %v177
    %v214 = vpack.c.b16 %v182, %v180
    %v215 = vpack.c.b16 %v183, %v181
    %248 = vmatprep.subr.bf16.mxu0 %v185
    %249 = vmatpush1.bf16.msra.mxu0 %v184
    %250 = vmatprep.subr.bf16.mxu0 %v187
    %251 = vmatpush1.bf16.msra.mxu0 %v186
    %252 = vmatprep.subr.bf16.mxu0 %v189
    %253 = vmatpush1.bf16.msra.mxu0 %v188
    %254 = vmatprep.subr.bf16.mxu0 %v191
    %255 = vmatpush1.bf16.msra.mxu0 %v190
    %256 = vmatprep.subr.bf16.mxu0 %v193
    %257 = vmatpush1.bf16.msra.mxu0 %v192
    %258 = vmatprep.subr.bf16.mxu0 %v195
    %259 = vmatpush1.bf16.msra.mxu0 %v194
    %260 = vmatprep.subr.bf16.mxu0 %v197
    %261 = vmatpush1.bf16.msra.mxu0 %v196
    %262 = vmatprep.subr.bf16.mxu0 %v199
    %263 = vmatpush1.bf16.msra.mxu0 %v198
    %264 = vmatprep.subr.bf16.mxu0 %v201
    %265 = vmatpush1.bf16.msra.mxu0 %v200
    %266 = vmatprep.subr.bf16.mxu0 %v203
    %267 = vmatpush1.bf16.msra.mxu0 %v202
    %268 = vmatprep.subr.bf16.mxu0 %v205
    %269 = vmatpush1.bf16.msra.mxu0 %v204
    %270 = vmatprep.subr.bf16.mxu0 %v207
    %271 = vmatpush1.bf16.msra.mxu0 %v206
    %272 = vmatprep.subr.bf16.mxu0 %v209
    %273 = vmatpush1.bf16.msra.mxu0 %v208
    %274 = vmatprep.subr.bf16.mxu0 %v211
    %275 = vmatpush1.bf16.msra.mxu0 %v210
    %276 = vmatprep.subr.bf16.mxu0 %v213
    %277 = vmatpush1.bf16.msra.mxu0 %v212
    %278 = vmatprep.subr.bf16.mxu0 %v215
    %279 = vmatpush1.bf16.msra.mxu0 %v214
    %280 = vmatprep.mubr.bf16.mxu0 %v85
    %281 = vmatmul.mubr.bf16.gmra.mrb[0].mxu0 %v78
    %v282 = vpop.f32.mrb[0].mxu0
    %v283 = vadd.f32 0.0, %v282
    %v284 = vpop.f32.mrb[0].mxu0
    %v285 = vadd.f32 0.0, %v284
    %v286 = vpop.f32.mrb[0].mxu0
    %v287 = vpop.f32.mrb[0].mxu0
    %288 = vdwg.mxu0
    %v289 = vld [vmem:[%s3] sm:$0xff]
    %v290 = vld [vmem:[%s3 + $0x8] sm:$0xff]
    %v291 = vld [vmem:[%s3 + $0x10] sm:$0xff]
    %v292 = vld [vmem:[%s3 + $0x18] sm:$0xff]
    %v295 = vunpack.c.l.b16 %v29
    %v296 = vunpack.c.l.b16 %v30
    %v297 = vpack.c.b16 %v296, %v295
    %v302 = vunpack.c.l.b16 %v289
    %v303 = vunpack.c.h.b16 %v289
    %v304 = vunpack.c.l.b16 %v290
    %v305 = vunpack.c.h.b16 %v290
    %v306 = vunpack.c.l.b16 %v291
    %v307 = vunpack.c.h.b16 %v291
    %v308 = vunpack.c.l.b16 %v292
    %v309 = vunpack.c.h.b16 %v292
    %v310 = vpack.c.b16 %v304, %v302
    %v311 = vpack.c.b16 %v305, %v303
    %v312 = vpack.c.b16 %v308, %v306
    %v313 = vpack.c.b16 %v309, %v307
    %vm318 = vcmask 261120
    %v320 = vsel %vm318, %v297, 0
    %322 = vmatprep.subr.bf16.mxu0 %v311
    %323 = vmatpush1.bf16.msra.mxu0 %v310
    %324 = vmatprep.subr.bf16.mxu0 %v313
    %325 = vmatpush1.bf16.msra.mxu0 %v312
    %326 = vmatprep.subr.bf16.mxu0 0
    %327 = vmatpush1.bf16.msra.mxu0 0
    %328 = vmatprep.subr.bf16.mxu0 0
    %329 = vmatpush1.bf16.msra.mxu0 0
    %330 = vmatprep.subr.bf16.mxu0 0
    %331 = vmatpush1.bf16.msra.mxu0 0
    %332 = vmatprep.subr.bf16.mxu0 0
    %333 = vmatpush1.bf16.msra.mxu0 0
    %334 = vmatprep.subr.bf16.mxu0 0
    %335 = vmatpush1.bf16.msra.mxu0 0
    %336 = vmatprep.subr.bf16.mxu0 0
    %337 = vmatpush1.bf16.msra.mxu0 0
    %338 = vmatprep.subr.bf16.mxu0 0
    %339 = vmatpush1.bf16.msra.mxu0 0
    %340 = vmatprep.subr.bf16.mxu0 0
    %341 = vmatpush1.bf16.msra.mxu0 0
    %342 = vmatprep.subr.bf16.mxu0 0
    %343 = vmatpush1.bf16.msra.mxu0 0
    %344 = vmatprep.subr.bf16.mxu0 0
    %345 = vmatpush1.bf16.msra.mxu0 0
    %346 = vmatprep.subr.bf16.mxu0 0
    %347 = vmatpush1.bf16.msra.mxu0 0
    %348 = vmatprep.subr.bf16.mxu0 0
    %349 = vmatpush1.bf16.msra.mxu0 0
    %350 = vmatprep.subr.bf16.mxu0 0
    %351 = vmatpush1.bf16.msra.mxu0 0
    %352 = vmatprep.subr.bf16.mxu0 0
    %353 = vmatpush1.bf16.msra.mxu0 0
    %354 = vmatprep.mubr.bf16.mxu0 0
    %355 = vmatmul.mubr.bf16.gmra.mrb[0].mxu0 %v320
    %v356 = vpop.f32.mrb[0].mxu0
    %v357 = vadd.f32 0.0, %v356
    %v358 = vpop.f32.mrb[0].mxu0
    %v359 = vadd.f32 0.0, %v358
    %v360 = vpop.f32.mrb[0].mxu0
    %v361 = vadd.f32 0.0, %v360
    %v362 = vpop.f32.mrb[0].mxu0
    %v363 = vadd.f32 0.0, %v362
    %364 = vdwg.mxu0
    %v365 = vld [vmem:[%s4] sm:$0x3]
    %v367 = vlaneseq
    %v368 = vshrl.u32 %v367, 7
    %v369 = vsub.s32 0, %v368
    %v370 = vrot.slane %v365, %v369
    %v371 = vlaneseq
    %v372 = vshrl.u32 %v371, 7
    %v373 = vsub.s32 1, %v372
    %v374 = vrot.slane %v365, %v373
    %v377 = vadd.f32 %v357, %v370
    %v378 = vadd.f32 %v359, %v374
    %v379 = vadd.f32 %v361, %v370
    %v380 = vadd.f32 %v363, %v374
    %v383 = vcombine.low %v283, %v285
    %v385 = vunpack.c.l.s4 1966171168
    %v386 = vunpack.c.0.s8 %v385
    %v387 = vlaneseq
    %v388 = vshrl.u32 %v387, 7
    %v389 = vsub.s32 %v386, %v388
    %v390 = vrot.slane %v383, %v389
    %v391 = vcombine.high %v390, %v390
    %v393 = vunpack.c.l.s4 1966171168
    %v394 = vunpack.c.0.s8 %v393
    %v395 = vlaneseq
    %v396 = vshrl.u32 %v395, 7
    %v397 = vsub.s32 %v394, %v396
    %v398 = vrot.slane %v390, %v397
    %v400 = vunpack.c.l.s4 1966171168
    %v401 = vunpack.c.0.s8 %v400
    %v402 = vlaneseq
    %v403 = vshrl.u32 %v402, 7
    %v404 = vsub.s32 %v401, %v403
    %v405 = vrot.slane %v391, %v404
    %v406 = vlaneseq
    %v407 = vshrl.u32 %v406, 7
    %v408 = vsub.s32 0, %v407
    %v409 = vrot.slane %v398, %v408
    %v410 = vlaneseq
    %v411 = vshrl.u32 %v410, 7
    %v412 = vsub.s32 1, %v411
    %v413 = vrot.slane %v398, %v412
    %v414 = vlaneseq
    %v415 = vshrl.u32 %v414, 7
    %v416 = vsub.s32 0, %v415
    %v417 = vrot.slane %v405, %v416
    %v418 = vlaneseq
    %v419 = vshrl.u32 %v418, 7
    %v420 = vsub.s32 1, %v419
    %v421 = vrot.slane %v405, %v420
    %v426 = vadd.f32 %v377, %v409
    %v427 = vadd.f32 %v378, %v413
    %v428 = vadd.f32 %v379, %v417
    %v429 = vadd.f32 %v380, %v421
    %v430 = vmax.f32 %v426, 0.0
    %v431 = vmax.f32 %v427, 0.0
    %v432 = vmax.f32 %v428, 0.0
    %v433 = vmax.f32 %v429, 0.0
    %v434 = vpack.c.bf16 %v430, %v430
    %v435 = vpack.c.bf16 %v431, %v431
    %v436 = vpack.c.bf16 %v432, %v432
    %v437 = vpack.c.bf16 %v433, %v433
    %v442 = vunpack.c.l.b16 %v434
    %v443 = vunpack.c.l.b16 %v435
    %v444 = vunpack.c.l.b16 %v436
    %v445 = vunpack.c.l.b16 %v437
    %v446 = vld [vmem:[%s5] sm:$0xf]
    %v447 = vld [vmem:[%s5 + $0x4] sm:$0xf]
    %v448 = vld [vmem:[%s5 + $0x8] sm:$0xf]
    %v449 = vld [vmem:[%s5 + $0xc] sm:$0xf]
    %v450 = vld [vmem:[%s5 + $0x10] sm:$0xf]
    %v451 = vld [vmem:[%s5 + $0x14] sm:$0xf]
    %v452 = vld [vmem:[%s5 + $0x18] sm:$0xf]
    %v453 = vld [vmem:[%s5 + $0x1c] sm:$0xf]
    %v454 = vld [vmem:[%s5 + $0x20] sm:$0xf]
    %v455 = vld [vmem:[%s5 + $0x24] sm:$0xf]
    %v456 = vld [vmem:[%s5 + $0x28] sm:$0xf]
    %v457 = vld [vmem:[%s5 + $0x2c] sm:$0xf]
    %v458 = vld [vmem:[%s5 + $0x30] sm:$0xf]
    %v459 = vld [vmem:[%s5 + $0x34] sm:$0xf]
    %v460 = vld [vmem:[%s5 + $0x38] sm:$0xf]
    %v461 = vld [vmem:[%s5 + $0x3c] sm:$0xf]
    %v462 = vld [vmem:[%s5 + $0x40] sm:$0xf]
    %v463 = vld [vmem:[%s5 + $0x44] sm:$0xf]
    %v464 = vld [vmem:[%s5 + $0x48] sm:$0xf]
    %v465 = vld [vmem:[%s5 + $0x4c] sm:$0xf]
    %v466 = vld [vmem:[%s5 + $0x50] sm:$0xf]
    %v467 = vld [vmem:[%s5 + $0x54] sm:$0xf]
    %v468 = vld [vmem:[%s5 + $0x58] sm:$0xf]
    %v469 = vld [vmem:[%s5 + $0x5c] sm:$0xf]
    %v470 = vld [vmem:[%s5 + $0x60] sm:$0xf]
    %v471 = vld [vmem:[%s5 + $0x64] sm:$0xf]
    %v472 = vld [vmem:[%s5 + $0x68] sm:$0xf]
    %v473 = vld [vmem:[%s5 + $0x6c] sm:$0xf]
    %v474 = vld [vmem:[%s5 + $0x70] sm:$0xf]
    %v475 = vld [vmem:[%s5 + $0x74] sm:$0xf]
    %v476 = vld [vmem:[%s5 + $0x78] sm:$0xf]
    %v477 = vld [vmem:[%s5 + $0x7c] sm:$0xf]
    %v478 = vld [vmem:[%s6] sm:$0x1]
    %v480 = vlaneseq
    %v481 = vshrl.u32 %v480, 7
    %v482 = vsub.s32 0, %v481
    %v483 = vrot.slane %v478, %v482
    %v485 = vpack.c.b16 %v444, %v442
    %v486 = vpack.c.b16 %v445, %v443
    %v521 = vunpack.c.l.b16 %v446
    %v522 = vunpack.c.l.b16 %v447
    %v523 = vunpack.c.l.b16 %v448
    %v524 = vunpack.c.l.b16 %v449
    %v525 = vunpack.c.l.b16 %v450
    %v526 = vunpack.c.l.b16 %v451
    %v527 = vunpack.c.l.b16 %v452
    %v528 = vunpack.c.l.b16 %v453
    %v529 = vunpack.c.l.b16 %v454
    %v530 = vunpack.c.l.b16 %v455
    %v531 = vunpack.c.l.b16 %v456
    %v532 = vunpack.c.l.b16 %v457
    %v533 = vunpack.c.l.b16 %v458
    %v534 = vunpack.c.l.b16 %v459
    %v535 = vunpack.c.l.b16 %v460
    %v536 = vunpack.c.l.b16 %v461
    %v537 = vunpack.c.l.b16 %v462
    %v538 = vunpack.c.l.b16 %v463
    %v539 = vunpack.c.l.b16 %v464
    %v540 = vunpack.c.l.b16 %v465
    %v541 = vunpack.c.l.b16 %v466
    %v542 = vunpack.c.l.b16 %v467
    %v543 = vunpack.c.l.b16 %v468
    %v544 = vunpack.c.l.b16 %v469
    %v545 = vunpack.c.l.b16 %v470
    %v546 = vunpack.c.l.b16 %v471
    %v547 = vunpack.c.l.b16 %v472
    %v548 = vunpack.c.l.b16 %v473
    %v549 = vunpack.c.l.b16 %v474
    %v550 = vunpack.c.l.b16 %v475
    %v551 = vunpack.c.l.b16 %v476
    %v552 = vunpack.c.l.b16 %v477
    %v553 = vpack.c.b16 %v522, %v521
    %v554 = vpack.c.b16 %v524, %v523
    %v555 = vpack.c.b16 %v526, %v525
    %v556 = vpack.c.b16 %v528, %v527
    %v557 = vpack.c.b16 %v530, %v529
    %v558 = vpack.c.b16 %v532, %v531
    %v559 = vpack.c.b16 %v534, %v533
    %v560 = vpack.c.b16 %v536, %v535
    %v561 = vpack.c.b16 %v538, %v537
    %v562 = vpack.c.b16 %v540, %v539
    %v563 = vpack.c.b16 %v542, %v541
    %v564 = vpack.c.b16 %v544, %v543
    %v565 = vpack.c.b16 %v546, %v545
    %v566 = vpack.c.b16 %v548, %v547
    %v567 = vpack.c.b16 %v550, %v549
    %v568 = vpack.c.b16 %v552, %v551
    %585 = vmatprep.subr.bf16.mxu0 0
    %586 = vmatpush1.bf16.msra.mxu0 %v553
    %587 = vmatprep.subr.bf16.mxu0 0
    %588 = vmatpush1.bf16.msra.mxu0 %v554
    %589 = vmatprep.subr.bf16.mxu0 0
    %590 = vmatpush1.bf16.msra.mxu0 %v555
    %591 = vmatprep.subr.bf16.mxu0 0
    %592 = vmatpush1.bf16.msra.mxu0 %v556
    %593 = vmatprep.subr.bf16.mxu0 0
    %594 = vmatpush1.bf16.msra.mxu0 %v557
    %595 = vmatprep.subr.bf16.mxu0 0
    %596 = vmatpush1.bf16.msra.mxu0 %v558
    %597 = vmatprep.subr.bf16.mxu0 0
    %598 = vmatpush1.bf16.msra.mxu0 %v559
    %599 = vmatprep.subr.bf16.mxu0 0
    %600 = vmatpush1.bf16.msra.mxu0 %v560
    %601 = vmatprep.subr.bf16.mxu0 0
    %602 = vmatpush1.bf16.msra.mxu0 %v561
    %603 = vmatprep.subr.bf16.mxu0 0
    %604 = vmatpush1.bf16.msra.mxu0 %v562
    %605 = vmatprep.subr.bf16.mxu0 0
    %606 = vmatpush1.bf16.msra.mxu0 %v563
    %607 = vmatprep.subr.bf16.mxu0 0
    %608 = vmatpush1.bf16.msra.mxu0 %v564
    %609 = vmatprep.subr.bf16.mxu0 0
    %610 = vmatpush1.bf16.msra.mxu0 %v565
    %611 = vmatprep.subr.bf16.mxu0 0
    %612 = vmatpush1.bf16.msra.mxu0 %v566
    %613 = vmatprep.subr.bf16.mxu0 0
    %614 = vmatpush1.bf16.msra.mxu0 %v567
    %615 = vmatprep.subr.bf16.mxu0 0
    %616 = vmatpush1.bf16.msra.mxu0 %v568
    %617 = vmatprep.mubr.bf16.mxu0 %v486
    %618 = vmatmul.mubr.bf16.gmra.mrb[0].mxu0 %v485
    %v619 = vpop.f32.mrb[0].mxu0
    %v620 = vadd.f32 %v483, %v619
    %v621 = vpop.f32.mrb[0].mxu0
    %v622 = vpop.f32.mrb[0].mxu0
    %v623 = vadd.f32 %v483, %v622
    %v624 = vpop.f32.mrb[0].mxu0
    %625 = vdwg.mxu0
    %v626 = vpack.c.bf16 %v623, %v620
    %v628 = vunpack.c.l.b16 %v626
    %v629 = vunpack.c.h.b16 %v626
    %v630 = vpack.c.b16 %v628, %v628
    %v631 = vpack.c.b16 %v629, %v629
    %634 = vst [vmem:[#allocation2] sm:$0xf] %v630
    %635 = vst [vmem:[#allocation2 + $0x4] sm:$0xf] %v631
    // Predicated region
    $region30: #{a_call__.1} parent=1 // pred_check
      _
    $region31: #{a_call__.1} parent=1 // pred_check_branch
      %637 = sbr.rel (0) target = $region33
    $region32: #{a_call__.1} parent=1 // pred_region
      %s639 = ssub.s32 128, 128
      %640 = vsyncadd [#allocation3], %s639
      %s641 = sshll.u32 [#allocation2], 4
      %s642 = int_to_ptr.vmem [resolvable:$true] %s641
      %647 = dma.vmem_to_hbm [thread:$0]  %s642, 128, %s7, [#allocation3], 64, 64, 4
    $region33: #{a_call__.1} parent=1 // pred_fallthru
      _
    // Predicated region
    $region34: #{a_call__.1} parent=1 // pred_check
      _
    $region35: #{a_call__.1} parent=1 // pred_check_branch
      %649 = sbr.rel (0) target = $region37
    $region36: #{a_call__.1} parent=1 // pred_region
      %650 = dma.done [#allocation3], 128
    $region37: #{a_call__.1} parent=1 // pred_fallthru
      _
    %651 = vsyncpa [#allocation3], 1

</llo_original>
